<compile_context>
chip_gen: v5e
topology: v5e:2x2
jax: 0.10.0
libtpu: 0.0.40
codegen_flags: <defaults>
</compile_context>

<pallas_src>
import jax
import jax.numpy as jnp
from jax.experimental import pallas as pl
from jax.experimental.pallas import tpu as pltpu


def _round_up(x, m):
    return (x + m - 1) // m * m


# ---------------------------------------------------------------------------
# Kernel: fused (folded-normalization) linear head on the MXU
# ---------------------------------------------------------------------------
def _folded_linear_kernel(x_ref, w_ref, b_ref, o_ref):
    # x_ref: (tm, D); w_ref: (D, tn); b_ref: (1, tn); o_ref: (tm, tn)
    o_ref[...] = (
        jnp.dot(x_ref[...], w_ref[...], preferred_element_type=jnp.float32)
        + b_ref[...]
    ).astype(o_ref.dtype)


def folded_linear(x_flat, w_folded, b_folded, *, tn=128):
    """x_flat: (N, D), w_folded: (D, K), b_folded: (1, K) -> (N, K) f32.

    Pads N to a sublane multiple (>=8) and K to a lane multiple (>=128) so the
    MXU result tile and the output stores are full-width, then slices back.
    """
    N, D = x_flat.shape
    _, K = w_folded.shape

    N_pad = _round_up(max(N, 8), 8)
    K_pad = _round_up(max(K, 128), 128)
    tm = min(N_pad, 128)
    tn = min(tn, K_pad)

    x_p = jnp.zeros((N_pad, D), x_flat.dtype).at[:N, :].set(x_flat)
    w_p = jnp.zeros((D, K_pad), w_folded.dtype).at[:, :K].set(w_folded)
    b_p = jnp.zeros((1, K_pad), b_folded.dtype).at[:, :K].set(b_folded)

    grid = (N_pad // tm, K_pad // tn)
    out_p = pl.pallas_call(
        _folded_linear_kernel,
        out_shape=jax.ShapeDtypeStruct((N_pad, K_pad), jnp.float32),
        grid_spec=pltpu.PrefetchScalarGridSpec(
            num_scalar_prefetch=0,
            grid=grid,
            in_specs=[
                pl.BlockSpec((tm, D), lambda i, j: (i, 0)),
                pl.BlockSpec((D, tn), lambda i, j: (0, j)),
                pl.BlockSpec((1, tn), lambda i, j: (0, j)),
            ],
            out_specs=pl.BlockSpec((tm, tn), lambda i, j: (i, j)),
        ),
        compiler_params=pltpu.CompilerParams(
            dimension_semantics=("parallel", "parallel"),
        ),
    )(x_p, w_p, b_p)
    return out_p[:N, :K]


# ---------------------------------------------------------------------------
# Optional standalone normalize kernel (lane-dense mul-add), kept for when the
# inner model is not foldable.  Not used on the main forward path.
# ---------------------------------------------------------------------------
def _normalize_kernel(x_ref, scale_ref, shift_ref, o_ref):
    # x_ref: (N_pad, D) lane-dense; scale/shift: (1, D) channel-broadcast rows.
    o_ref[...] = x_ref[...] * scale_ref[...] + shift_ref[...]


def normalize(x, mean, std):
    """(x - mean) / std as x*scale + shift on a flattened lane-dense layout."""
    N, C, H, W = x.shape
    D = C * H * W  # 3*16*16 = 768, multiple of 128 -> unmasked full-width vst
    scale_flat = jnp.repeat((1.0 / std).reshape(C), H * W)[None, :]
    shift_flat = jnp.repeat((-mean / std).reshape(C), H * W)[None, :]

    N_pad = _round_up(max(N, 8), 8)
    x_p = jnp.zeros((N_pad, D), x.dtype).at[:N, :].set(x.reshape(N, D))

    out = pl.pallas_call(
        _normalize_kernel,
        out_shape=jax.ShapeDtypeStruct((N_pad, D), x.dtype),
        grid_spec=pltpu.PrefetchScalarGridSpec(
            num_scalar_prefetch=0,
            grid=(1,),  # whole tensor in one step; tiny -> grid steps are pure overhead
            in_specs=[
                pl.BlockSpec((N_pad, D), lambda i: (0, 0)),
                pl.BlockSpec((1, D), lambda i: (0, 0)),
                pl.BlockSpec((1, D), lambda i: (0, 0)),
            ],
            out_specs=pl.BlockSpec((N_pad, D), lambda i: (0, 0)),
        ),
        compiler_params=pltpu.CompilerParams(
            dimension_semantics=("arbitrary",),
        ),
    )(x_p, scale_flat, shift_flat)
    return out[:N].reshape(N, C, H, W)


# ---------------------------------------------------------------------------
# NormalizedModel forward (normalization folded into the linear stand-in)
# ---------------------------------------------------------------------------
def normalized_model_forward(x, mean, std, w, b):
    """y = model((x - mean)/std) with model = flatten -> linear stand-in.

    ((x*s + t) @ W + b) == x @ (s[:, None] * W) + (t @ W + b), so the affine
    normalization is folded into the weights once in the wrapper and only a
    single Pallas matmul kernel touches the activations.
    """
    N, C, H, W = x.shape

    scale_c = (1.0 / std).reshape(C)        # (C,)
    shift_c = (-mean / std).reshape(C)      # (C,)
    scale_flat = jnp.repeat(scale_c, H * W)  # (D,)  NCHW flatten order
    shift_flat = jnp.repeat(shift_c, H * W)  # (D,)

    w_folded = scale_flat[:, None] * w                 # (D, K)
    b_folded = shift_flat[None, :] @ w + b             # (1, K)

    x_flat = x.reshape(N, -1)
    return folded_linear(x_flat, w_folded, b_folded)


if __name__ == "__main__":
    key = jax.random.PRNGKey(0)
    k_x, k_w, k_b = jax.random.split(key, 3)

    # Small shapes implied by the module: NCHW with C=3 (mean/std reshape(1,3,1,1)).
    N, C, H, W = 2, 3, 16, 16
    K = 10  # stand-in classifier width

    x = jax.random.normal(k_x, (N, C, H, W), dtype=jnp.float32)

    # Deterministic buffers (ImageNet-style constants).
    mean = jnp.array([0.485, 0.456, 0.406], dtype=jnp.float32).reshape(1, 3, 1, 1)
    std = jnp.array([0.229, 0.224, 0.225], dtype=jnp.float32).reshape(1, 3, 1, 1)

    # Deterministic stand-in model parameters.
    D = C * H * W
    w = jax.random.normal(k_w, (D, K), dtype=jnp.float32) * 0.02
    b = jax.random.normal(k_b, (1, K), dtype=jnp.float32) * 0.02

    # Main path: folded normalization + single matmul kernel.
    out = jax.block_until_ready(normalized_model_forward(x, mean, std, w, b))
    ref = ((x - mean) / std).reshape(N, -1) @ w + b
    assert out.shape == (N, K)
    assert jnp.allclose(out, ref, atol=1e-4, rtol=1e-4)

    # Standalone lane-dense normalize kernel (for non-foldable inner models).
    x_norm = jax.block_until_ready(normalize(x, mean, std))
    assert jnp.allclose(x_norm, (x - mean) / std, atol=1e-5, rtol=1e-5)

    print("KERNEL_OK")
</pallas_src>

<mosaic_0001>
module attributes {stable_mosaic.version = 11 : i64} {
  func.func @_folded_linear_kernel(%arg0: i32, %arg1: i32, %arg2: memref<8x768xf32, #tpu.memory_space<vmem>>, %arg3: memref<768x128xf32, #tpu.memory_space<vmem>>, %arg4: memref<1x128xf32, #tpu.memory_space<vmem>>, %arg5: memref<8x128xf32, #tpu.memory_space<vmem>>) attributes {dimension_semantics = [#tpu.dimension_semantics<parallel>, #tpu.dimension_semantics<parallel>], iteration_bounds = array<i64: 1, 1>, scalar_prefetch = 0 : i64, scratch_operands = 0 : i64, tpu.core_type = #tpu.core_type<tc>, window_params = [{transform_indices = @transform_0, window_bounds = array<i64: 8, 768>}, {transform_indices = @transform_1, window_bounds = array<i64: 768, 128>}, {transform_indices = @transform_2, window_bounds = array<i64: 1, 128>}, {transform_indices = @transform_3, window_bounds = array<i64: 8, 128>}]} {
    %c0 = arith.constant 0 : index
    %c0_0 = arith.constant 0 : index
    %0 = vector.load %arg2[%c0, %c0_0] : memref<8x768xf32, #tpu.memory_space<vmem>>, vector<8x768xf32>
    %c0_1 = arith.constant 0 : index
    %c0_2 = arith.constant 0 : index
    %1 = vector.load %arg3[%c0_1, %c0_2] : memref<768x128xf32, #tpu.memory_space<vmem>>, vector<768x128xf32>
    %cst = arith.constant dense<0.000000e+00> : vector<8x128xf32>
    %2 = tpu.matmul %0, %1, %cst {dimension_numbers = #tpu.dot_dimension_numbers<[1], [0], [0], [1], [0, 0, 1, 1], [], []>} : vector<8x768xf32>, vector<768x128xf32>, vector<8x128xf32> -> vector<8x128xf32>
    %c0_3 = arith.constant 0 : index
    %c0_4 = arith.constant 0 : index
    %3 = vector.load %arg4[%c0_3, %c0_4] : memref<1x128xf32, #tpu.memory_space<vmem>>, vector<1x128xf32>
    %4 = vector.broadcast %3 : vector<1x128xf32> to vector<8x128xf32>
    %5 = arith.addf %2, %4 : vector<8x128xf32>
    %c0_5 = arith.constant 0 : index
    %c0_6 = arith.constant 0 : index
    %6 = vector.load %arg5[%c0_5, %c0_6] : memref<8x128xf32, #tpu.memory_space<vmem>>, vector<8x128xf32>
    tpu.vector_store %arg5[%c0_5, %c0_6], %5 {strides = array<i32>} : memref<8x128xf32, #tpu.memory_space<vmem>>, vector<8x128xf32>,
    return
  }
  func.func @transform_0(%arg0: i32, %arg1: i32) -> (i32, i32) {
    %c0_i32 = arith.constant 0 : i32
    %c0_i32_0 = arith.constant 0 : i32
    return %arg0, %c0_i32 : i32, i32
  }
  func.func @transform_1(%arg0: i32, %arg1: i32) -> (i32, i32) {
    %c0_i32 = arith.constant 0 : i32
    %c0_i32_0 = arith.constant 0 : i32
    return %c0_i32, %arg1 : i32, i32
  }
  func.func @transform_2(%arg0: i32, %arg1: i32) -> (i32, i32) {
    %c0_i32 = arith.constant 0 : i32
    %c0_i32_0 = arith.constant 0 : i32
    return %c0_i32, %arg1 : i32, i32
  }
  func.func @transform_3(%arg0: i32, %arg1: i32) -> (i32, i32) {
    %c0_i32 = arith.constant 0 : i32
    return %arg0, %arg1 : i32, i32
  }
}

</mosaic_0001>

<llo_original>
// kernel: tpu_custom_call.1
$region0: #{tpu_custom_call.1}
  #allocation0 [shape = 'u32[]', space=smem, size = 0x4, offset = 0x4, fixed_abs, tag = 'smem constant byte address 0x4 - core index']
  #allocation1 [shape = 'u32[72,128]{1,0:T(1,128)}', space=vmem, size = 0x9000, scoped, tag = 'internal scratch']
  %s0 = inlined_call_operand.hbm [shape: f32[8,768], index: 0, kind: input, shape index: {}]
  %s1 = inlined_call_operand.hbm [shape: f32[768,128], index: 1, kind: input, shape index: {}]
  %s2 = inlined_call_operand.vmem [shape: f32[1,128], index: 2, kind: input, shape index: {}]
  %s3 = inlined_call_operand.hbm [shape: f32[8,128], index: 3, kind: output, shape index: {}]
  %s4 = sld [smem:[#allocation0]]
  $region30: #{tpu_custom_call.1} parent=0
    _
  %s6 = ssub.s32 1, %s4
  %s7 = scalar_select 0, %s6, %s4
  $region1: #{tpu_custom_call.1} parent=0
    #allocation2 [shape = 'u8[24576]{0}', space=vmem, size = 0x6000, scoped, tag = 'input window, operand 0, single buffered']
    #allocation3 [shape = 's32[1]{0}', space=sflag, size = 0x4, scoped, tag = 'scoped memory for tpu_custom_call.1']
    #allocation4 [shape = 's32[1]{0}', space=sflag, size = 0x4, scoped, tag = 'scoped memory for tpu_custom_call.1']
    #allocation5 [shape = 'u8[393216]{0}', space=vmem, size = 0x60000, scoped, tag = 'input window, operand 1, single buffered']
    #allocation6 [shape = 's32[1]{0}', space=sflag, size = 0x4, scoped, tag = 'scoped memory for tpu_custom_call.1']
    #allocation7 [shape = 'u8[4096]{0}', space=vmem, size = 0x1000, scoped, tag = 'output window, operand 0, single buffered']
    %8 = vsyncpa [#allocation3], 0
    %9 = vsyncpa [#allocation6], 0
    %10 = vsyncpa [#allocation4], 0
    // Predicated region
    $region2: #{tpu_custom_call.1} parent=1 // pred_check
      _
    $region3: #{tpu_custom_call.1} parent=1 // pred_check_branch
      %12 = sbr.rel (0) target = $region5
    $region4: #{tpu_custom_call.1} parent=1 // pred_region
      %14 = vsyncadd [#allocation3], 0
      %s16 = sshll.u32 %s0, 4
      %s17 = int_to_ptr.hbm [resolvable:$true] %s16
      %s18 = sshll.u32 [#allocation2], 4
      %s19 = int_to_ptr.vmem [resolvable:$true] %s18
      %21 = dma.hbm_to_vmem [thread:$0]  %s17, 768, %s19, [#allocation3]
    $region5: #{tpu_custom_call.1} parent=1 // pred_fallthru
      _
    // Predicated region
    $region6: #{tpu_custom_call.1} parent=1 // pred_check
      _
    $region7: #{tpu_custom_call.1} parent=1 // pred_check_branch
      %23 = sbr.rel (0) target = $region9
    $region8: #{tpu_custom_call.1} parent=1 // pred_region
      %25 = vsyncadd [#allocation6], 0
      %s26 = sshll.u32 %s1, 4
      %s27 = int_to_ptr.hbm [resolvable:$true] %s26
      %s28 = sshll.u32 [#allocation5], 4
      %s29 = int_to_ptr.vmem [resolvable:$true] %s28
      %34 = dma.hbm_to_vmem [thread:$0]  %s27, 12288, %s29, [#allocation6], 128, 128, 8
    $region9: #{tpu_custom_call.1} parent=1 // pred_fallthru
      _
    // Predicated region
    $region10: #{tpu_custom_call.1} parent=1 // pred_check
      _
    $region11: #{tpu_custom_call.1} parent=1 // pred_check_branch
      %36 = sbr.rel (0) target = $region13
    $region12: #{tpu_custom_call.1} parent=1 // pred_region
      _
    $region13: #{tpu_custom_call.1} parent=1 // pred_fallthru
      _
    // Predicated region
    $region14: #{tpu_custom_call.1} parent=1 // pred_check
      _
    $region15: #{tpu_custom_call.1} parent=1 // pred_check_branch
      %38 = sbr.rel (0) target = $region17
    $region16: #{tpu_custom_call.1} parent=1 // pred_region
      %40 = dma.done [#allocation3], 768
    $region17: #{tpu_custom_call.1} parent=1 // pred_fallthru
      _
    // Predicated region
    $region18: #{tpu_custom_call.1} parent=1 // pred_check
      _
    $region19: #{tpu_custom_call.1} parent=1 // pred_check_branch
      %42 = sbr.rel (0) target = $region21
    $region20: #{tpu_custom_call.1} parent=1 // pred_region
      %44 = dma.done [#allocation6], 12288
    $region21: #{tpu_custom_call.1} parent=1 // pred_fallthru
      _
    %v45 = vld [vmem:[#allocation2] sm:$0xff]
    %v46 = vld [vmem:[#allocation2 + $0x8] sm:$0xff]
    %v47 = vld [vmem:[#allocation2 + $0x10] sm:$0xff]
    %v48 = vld [vmem:[#allocation2 + $0x18] sm:$0xff]
    %v49 = vld [vmem:[#allocation2 + $0x20] sm:$0xff]
    %v50 = vld [vmem:[#allocation2 + $0x28] sm:$0xff]
    %v51 = vld [vmem:[#allocation5] sm:$0xff]
    %v52 = vld [vmem:[#allocation5 + $0x8] sm:$0xff]
    %v53 = vld [vmem:[#allocation5 + $0x10] sm:$0xff]
    %v54 = vld [vmem:[#allocation5 + $0x18] sm:$0xff]
    %v55 = vld [vmem:[#allocation5 + $0x20] sm:$0xff]
    %v56 = vld [vmem:[#allocation5 + $0x28] sm:$0xff]
    %v57 = vld [vmem:[#allocation5 + $0x30] sm:$0xff]
    %v58 = vld [vmem:[#allocation5 + $0x38] sm:$0xff]
    %v59 = vld [vmem:[#allocation5 + $0x40] sm:$0xff]
    %v60 = vld [vmem:[#allocation5 + $0x48] sm:$0xff]
    %v61 = vld [vmem:[#allocation5 + $0x50] sm:$0xff]
    %v62 = vld [vmem:[#allocation5 + $0x58] sm:$0xff]
    %v63 = vld [vmem:[#allocation5 + $0x60] sm:$0xff]
    %v64 = vld [vmem:[#allocation5 + $0x68] sm:$0xff]
    %v65 = vld [vmem:[#allocation5 + $0x70] sm:$0xff]
    %v66 = vld [vmem:[#allocation5 + $0x78] sm:$0xff]
    %v67 = vld [vmem:[#allocation5 + $0x80] sm:$0xff]
    %v68 = vld [vmem:[#allocation5 + $0x88] sm:$0xff]
    %v69 = vld [vmem:[#allocation5 + $0x90] sm:$0xff]
    %v70 = vld [vmem:[#allocation5 + $0x98] sm:$0xff]
    %v71 = vld [vmem:[#allocation5 + $0xa0] sm:$0xff]
    %v72 = vld [vmem:[#allocation5 + $0xa8] sm:$0xff]
    %v73 = vld [vmem:[#allocation5 + $0xb0] sm:$0xff]
    %v74 = vld [vmem:[#allocation5 + $0xb8] sm:$0xff]
    %v75 = vld [vmem:[#allocation5 + $0xc0] sm:$0xff]
    %v76 = vld [vmem:[#allocation5 + $0xc8] sm:$0xff]
    %v77 = vld [vmem:[#allocation5 + $0xd0] sm:$0xff]
    %v78 = vld [vmem:[#allocation5 + $0xd8] sm:$0xff]
    %v79 = vld [vmem:[#allocation5 + $0xe0] sm:$0xff]
    %v80 = vld [vmem:[#allocation5 + $0xe8] sm:$0xff]
    %v81 = vld [vmem:[#allocation5 + $0xf0] sm:$0xff]
    %v82 = vld [vmem:[#allocation5 + $0xf8] sm:$0xff]
    %v83 = vld [vmem:[#allocation5 + $0x100] sm:$0xff]
    %v84 = vld [vmem:[#allocation5 + $0x108] sm:$0xff]
    %v85 = vld [vmem:[#allocation5 + $0x110] sm:$0xff]
    %v86 = vld [vmem:[#allocation5 + $0x118] sm:$0xff]
    %v87 = vld [vmem:[#allocation5 + $0x120] sm:$0xff]
    %v88 = vld [vmem:[#allocation5 + $0x128] sm:$0xff]
    %v89 = vld [vmem:[#allocation5 + $0x130] sm:$0xff]
    %v90 = vld [vmem:[#allocation5 + $0x138] sm:$0xff]
    %v91 = vld [vmem:[#allocation5 + $0x140] sm:$0xff]
    %v92 = vld [vmem:[#allocation5 + $0x148] sm:$0xff]
    %v93 = vld [vmem:[#allocation5 + $0x150] sm:$0xff]
    %v94 = vld [vmem:[#allocation5 + $0x158] sm:$0xff]
    %v95 = vld [vmem:[#allocation5 + $0x160] sm:$0xff]
    %v96 = vld [vmem:[#allocation5 + $0x168] sm:$0xff]
    %v97 = vld [vmem:[#allocation5 + $0x170] sm:$0xff]
    %v98 = vld [vmem:[#allocation5 + $0x178] sm:$0xff]
    %v99 = vld [vmem:[#allocation5 + $0x180] sm:$0xff]
    %v100 = vld [vmem:[#allocation5 + $0x188] sm:$0xff]
    %v101 = vld [vmem:[#allocation5 + $0x190] sm:$0xff]
    %v102 = vld [vmem:[#allocation5 + $0x198] sm:$0xff]
    %v103 = vld [vmem:[#allocation5 + $0x1a0] sm:$0xff]
    %v104 = vld [vmem:[#allocation5 + $0x1a8] sm:$0xff]
    %v105 = vld [vmem:[#allocation5 + $0x1b0] sm:$0xff]
    %v106 = vld [vmem:[#allocation5 + $0x1b8] sm:$0xff]
    %v107 = vld [vmem:[#allocation5 + $0x1c0] sm:$0xff]
    %v108 = vld [vmem:[#allocation5 + $0x1c8] sm:$0xff]
    %v109 = vld [vmem:[#allocation5 + $0x1d0] sm:$0xff]
    %v110 = vld [vmem:[#allocation5 + $0x1d8] sm:$0xff]
    %v111 = vld [vmem:[#allocation5 + $0x1e0] sm:$0xff]
    %v112 = vld [vmem:[#allocation5 + $0x1e8] sm:$0xff]
    %v113 = vld [vmem:[#allocation5 + $0x1f0] sm:$0xff]
    %v114 = vld [vmem:[#allocation5 + $0x1f8] sm:$0xff]
    %v115 = vld [vmem:[#allocation5 + $0x200] sm:$0xff]
    %v116 = vld [vmem:[#allocation5 + $0x208] sm:$0xff]
    %v117 = vld [vmem:[#allocation5 + $0x210] sm:$0xff]
    %v118 = vld [vmem:[#allocation5 + $0x218] sm:$0xff]
    %v119 = vld [vmem:[#allocation5 + $0x220] sm:$0xff]
    %v120 = vld [vmem:[#allocation5 + $0x228] sm:$0xff]
    %v121 = vld [vmem:[#allocation5 + $0x230] sm:$0xff]
    %v122 = vld [vmem:[#allocation5 + $0x238] sm:$0xff]
    %v123 = vld [vmem:[#allocation5 + $0x240] sm:$0xff]
    %v124 = vld [vmem:[#allocation5 + $0x248] sm:$0xff]
    %v125 = vld [vmem:[#allocation5 + $0x250] sm:$0xff]
    %v126 = vld [vmem:[#allocation5 + $0x258] sm:$0xff]
    %v127 = vld [vmem:[#allocation5 + $0x260] sm:$0xff]
    %v128 = vld [vmem:[#allocation5 + $0x268] sm:$0xff]
    %v129 = vld [vmem:[#allocation5 + $0x270] sm:$0xff]
    %v130 = vld [vmem:[#allocation5 + $0x278] sm:$0xff]
    %v131 = vld [vmem:[#allocation5 + $0x280] sm:$0xff]
    %v132 = vld [vmem:[#allocation5 + $0x288] sm:$0xff]
    %v133 = vld [vmem:[#allocation5 + $0x290] sm:$0xff]
    %v134 = vld [vmem:[#allocation5 + $0x298] sm:$0xff]
    %v135 = vld [vmem:[#allocation5 + $0x2a0] sm:$0xff]
    %v136 = vld [vmem:[#allocation5 + $0x2a8] sm:$0xff]
    %v137 = vld [vmem:[#allocation5 + $0x2b0] sm:$0xff]
    %v138 = vld [vmem:[#allocation5 + $0x2b8] sm:$0xff]
    %v139 = vld [vmem:[#allocation5 + $0x2c0] sm:$0xff]
    %v140 = vld [vmem:[#allocation5 + $0x2c8] sm:$0xff]
    %v141 = vld [vmem:[#allocation5 + $0x2d0] sm:$0xff]
    %v142 = vld [vmem:[#allocation5 + $0x2d8] sm:$0xff]
    %v143 = vld [vmem:[#allocation5 + $0x2e0] sm:$0xff]
    %v144 = vld [vmem:[#allocation5 + $0x2e8] sm:$0xff]
    %v145 = vld [vmem:[#allocation5 + $0x2f0] sm:$0xff]
    %v146 = vld [vmem:[#allocation5 + $0x2f8] sm:$0xff]
    %v147 = vld [vmem:[%s2] sm:$0x1]
    %v149 = vperm.slane %v147, 0
    %151 = vmatpush.msra.mxu0 %v66
    %152 = vmatpush.msra.mxu0 %v65
    %153 = vmatpush.msra.mxu0 %v64
    %154 = vmatpush.msra.mxu0 %v63
    %155 = vmatpush.msra.mxu0 %v62
    %156 = vmatpush.msra.mxu0 %v61
    %157 = vmatpush.msra.mxu0 %v60
    %158 = vmatpush.msra.mxu0 %v59
    %159 = vmatpush.msra.mxu0 %v58
    %160 = vmatpush.msra.mxu0 %v57
    %161 = vmatpush.msra.mxu0 %v56
    %162 = vmatpush.msra.mxu0 %v55
    %163 = vmatpush.msra.mxu0 %v54
    %164 = vmatpush.msra.mxu0 %v53
    %165 = vmatpush.msra.mxu0 %v52
    %166 = vmatpush.msra.mxu0 %v51
    %167 = vmatmul.f32.gmra.mxu0 %v45
    %v168 = vpop.f32.mrf.mxu0
    %v169 = vadd.f32 %v149, %v168
    %170 = vdwg.mxu0
    %171 = vmatpush.msra.mxu0 %v82
    %172 = vmatpush.msra.mxu0 %v81
    %173 = vmatpush.msra.mxu0 %v80
    %174 = vmatpush.msra.mxu0 %v79
    %175 = vmatpush.msra.mxu0 %v78
    %176 = vmatpush.msra.mxu0 %v77
    %177 = vmatpush.msra.mxu0 %v76
    %178 = vmatpush.msra.mxu0 %v75
    %179 = vmatpush.msra.mxu0 %v74
    %180 = vmatpush.msra.mxu0 %v73
    %181 = vmatpush.msra.mxu0 %v72
    %182 = vmatpush.msra.mxu0 %v71
    %183 = vmatpush.msra.mxu0 %v70
    %184 = vmatpush.msra.mxu0 %v69
    %185 = vmatpush.msra.mxu0 %v68
    %186 = vmatpush.msra.mxu0 %v67
    %187 = vmatmul.f32.gmra.mxu0 %v46
    %v188 = vpop.f32.mrf.mxu0
    %v189 = vadd.f32 %v169, %v188
    %190 = vdwg.mxu0
    %191 = vmatpush.msra.mxu0 %v98
    %192 = vmatpush.msra.mxu0 %v97
    %193 = vmatpush.msra.mxu0 %v96
    %194 = vmatpush.msra.mxu0 %v95
    %195 = vmatpush.msra.mxu0 %v94
    %196 = vmatpush.msra.mxu0 %v93
    %197 = vmatpush.msra.mxu0 %v92
    %198 = vmatpush.msra.mxu0 %v91
    %199 = vmatpush.msra.mxu0 %v90
    %200 = vmatpush.msra.mxu0 %v89
    %201 = vmatpush.msra.mxu0 %v88
    %202 = vmatpush.msra.mxu0 %v87
    %203 = vmatpush.msra.mxu0 %v86
    %204 = vmatpush.msra.mxu0 %v85
    %205 = vmatpush.msra.mxu0 %v84
    %206 = vmatpush.msra.mxu0 %v83
    %207 = vmatmul.f32.gmra.mxu0 %v47
    %v208 = vpop.f32.mrf.mxu0
    %v209 = vadd.f32 %v189, %v208
    %210 = vdwg.mxu0
    %211 = vmatpush.msra.mxu0 %v114
    %212 = vmatpush.msra.mxu0 %v113
    %213 = vmatpush.msra.mxu0 %v112
    %214 = vmatpush.msra.mxu0 %v111
    %215 = vmatpush.msra.mxu0 %v110
    %216 = vmatpush.msra.mxu0 %v109
    %217 = vmatpush.msra.mxu0 %v108
    %218 = vmatpush.msra.mxu0 %v107
    %219 = vmatpush.msra.mxu0 %v106
    %220 = vmatpush.msra.mxu0 %v105
    %221 = vmatpush.msra.mxu0 %v104
    %222 = vmatpush.msra.mxu0 %v103
    %223 = vmatpush.msra.mxu0 %v102
    %224 = vmatpush.msra.mxu0 %v101
    %225 = vmatpush.msra.mxu0 %v100
    %226 = vmatpush.msra.mxu0 %v99
    %227 = vmatmul.f32.gmra.mxu0 %v48
    %v228 = vpop.f32.mrf.mxu0
    %v229 = vadd.f32 %v209, %v228
    %230 = vdwg.mxu0
    %231 = vmatpush.msra.mxu0 %v130
    %232 = vmatpush.msra.mxu0 %v129
    %233 = vmatpush.msra.mxu0 %v128
    %234 = vmatpush.msra.mxu0 %v127
    %235 = vmatpush.msra.mxu0 %v126
    %236 = vmatpush.msra.mxu0 %v125
    %237 = vmatpush.msra.mxu0 %v124
    %238 = vmatpush.msra.mxu0 %v123
    %239 = vmatpush.msra.mxu0 %v122
    %240 = vmatpush.msra.mxu0 %v121
    %241 = vmatpush.msra.mxu0 %v120
    %242 = vmatpush.msra.mxu0 %v119
    %243 = vmatpush.msra.mxu0 %v118
    %244 = vmatpush.msra.mxu0 %v117
    %245 = vmatpush.msra.mxu0 %v116
    %246 = vmatpush.msra.mxu0 %v115
    %247 = vmatmul.f32.gmra.mxu0 %v49
    %v248 = vpop.f32.mrf.mxu0
    %v249 = vadd.f32 %v229, %v248
    %250 = vdwg.mxu0
    %251 = vmatpush.msra.mxu0 %v146
    %252 = vmatpush.msra.mxu0 %v145
    %253 = vmatpush.msra.mxu0 %v144
    %254 = vmatpush.msra.mxu0 %v143
    %255 = vmatpush.msra.mxu0 %v142
    %256 = vmatpush.msra.mxu0 %v141
    %257 = vmatpush.msra.mxu0 %v140
    %258 = vmatpush.msra.mxu0 %v139
    %259 = vmatpush.msra.mxu0 %v138
    %260 = vmatpush.msra.mxu0 %v137
    %261 = vmatpush.msra.mxu0 %v136
    %262 = vmatpush.msra.mxu0 %v135
    %263 = vmatpush.msra.mxu0 %v134
    %264 = vmatpush.msra.mxu0 %v133
    %265 = vmatpush.msra.mxu0 %v132
    %266 = vmatpush.msra.mxu0 %v131
    %267 = vmatmul.f32.gmra.mxu0 %v50
    %v268 = vpop.f32.mrf.mxu0
    %v269 = vadd.f32 %v249, %v268
    %270 = vdwg.mxu0
    %271 = vst [vmem:[#allocation7] sm:$0xff] %v269
    // Predicated region
    $region22: #{tpu_custom_call.1} parent=1 // pred_check
      _
    $region23: #{tpu_custom_call.1} parent=1 // pred_check_branch
      %273 = sbr.rel (0) target = $region25
    $region24: #{tpu_custom_call.1} parent=1 // pred_region
      %275 = vsyncadd [#allocation4], 0
      %s277 = sshll.u32 [#allocation7], 4
      %s278 = int_to_ptr.vmem [resolvable:$true] %s277
      %s279 = sshll.u32 %s3, 4
      %s280 = int_to_ptr.hbm [resolvable:$true] %s279
      %282 = dma.vmem_to_hbm [thread:$0]  %s278, 128, %s280, [#allocation4]
    $region25: #{tpu_custom_call.1} parent=1 // pred_fallthru
      _
    // Predicated region
    $region26: #{tpu_custom_call.1} parent=1 // pred_check
      _
    $region27: #{tpu_custom_call.1} parent=1 // pred_check_branch
      %284 = sbr.rel (0) target = $region29
    $region28: #{tpu_custom_call.1} parent=1 // pred_region
      %286 = dma.done [#allocation4], 128
    $region29: #{tpu_custom_call.1} parent=1 // pred_fallthru
      _
    %287 = vsyncpa [#allocation3], 1
    %288 = vsyncpa [#allocation6], 1
    %289 = vsyncpa [#allocation4], 1

</llo_original>
